<compile_context>
chip_gen: v7x
topology: tpu7x:2x2x1
jax: 0.10.0
libtpu: 0.0.40
codegen_flags: <defaults>
</compile_context>

<pallas_src>
import functools

import numpy as np
import jax
import jax.numpy as jnp
from jax.experimental import pallas as pl
from jax.experimental.pallas import tpu as pltpu

OUT_H = OUT_W = 224
OUT_W_PAD = 256          # lane-dense output width (multiple of 128); sliced to 224 in wrapper


def _bilinear_matrix(out_size: int, in_size: int) -> np.ndarray:
    """Row-interpolation matrix matching F.interpolate(mode='bilinear',
    align_corners=False): out = W @ in  (applied per axis)."""
    scale = in_size / out_size
    o = np.arange(out_size, dtype=np.float64)
    src = (o + 0.5) * scale - 0.5
    src = np.maximum(src, 0.0)                       # PyTorch clamps negatives to 0
    i0 = np.minimum(np.floor(src).astype(np.int64), in_size - 1)
    i1 = np.minimum(i0 + 1, in_size - 1)
    lam = (src - i0).astype(np.float32)
    W = np.zeros((out_size, in_size), dtype=np.float32)
    W[np.arange(out_size), i0] += (1.0 - lam)
    W[np.arange(out_size), i1] += lam
    return W


@functools.lru_cache(maxsize=None)
def _interp_constants(mask_h: int, mask_w: int):
    """Static interpolation matrices, built once per (h, w) and cached on device.
    Stored as bf16 — they only ever feed the MXU."""
    wy = _bilinear_matrix(OUT_H, mask_h)                       # (224, h)
    wx = _bilinear_matrix(OUT_W, mask_w)                       # (224, w)
    wxT_pad = np.zeros((mask_w, OUT_W_PAD), dtype=np.float32)  # (w, 256) lane-dense
    wxT_pad[:, :OUT_W] = wx.T
    return (jnp.asarray(wy).astype(jnp.bfloat16),
            jnp.asarray(wxT_pad).astype(jnp.bfloat16))


def _mdetr_seg_kernel(logits_ref, masks_rows_ref, wy_ref, wxT_ref, out_ref,
                      *, threshold, num_queries, mask_h):
    # logits: (Q, C) f32     masks_rows: (Q*h, w) bf16
    # wy:     (224, h) bf16  wxT:        (w, 256) bf16     out: (224, 256) int8
    logits = logits_ref[...].astype(jnp.float32)

    # keep_q  <=>  1 - softmax(logits)[q, -1] > thr  <=>  e_last < (1 - thr) * sum(e)
    # (no divide; strict '<' preserves the PyTorch `probas > thr` semantics)
    m = jnp.max(logits, axis=-1, keepdims=True)
    e = jnp.exp(logits - m)
    denom = jnp.sum(e, axis=-1, keepdims=True)
    keep = e[:, -1:] < (1.0 - threshold) * denom              # (Q, 1) bool

    # index of the first kept query (== Q if none kept)
    q_iota = jax.lax.broadcasted_iota(jnp.int32, (num_queries, 1), 0)
    first_idx = jnp.min(jnp.where(keep, q_iota, num_queries))
    any_kept = first_idx < num_queries
    sel_q = jnp.minimum(first_idx, num_queries - 1)           # clamp: no OOB VMEM read

    # Slice out only the selected query's (h, w) mask and bilinearly upsample it:
    #   up = wy @ masks[sel_q] @ wx^T    (two small bf16 MXU matmuls, f32 accumulate)
    row_start = pl.multiple_of(sel_q * mask_h, mask_h)
    sel = masks_rows_ref[pl.ds(row_start, mask_h), :]                       # (h, w)
    t = jnp.dot(sel, wxT_ref[...], preferred_element_type=jnp.float32)      # (h, 256)
    up = jnp.dot(wy_ref[...], t.astype(jnp.bfloat16),
                 preferred_element_type=jnp.float32)                        # (224, 256)

    # sigmoid(x) > 0.5  <=>  x > 0 ; force all-zero when nothing is kept.
    out_ref[...] = ((up > 0.0) & any_kept).astype(jnp.int8)


def mdetr_seg_postprocess(pred_logits, pred_masks, threshold):
    """pred_logits: (1, Q, C), pred_masks: (1, Q, h, w) -> (224, 224) f32 {0, 1}."""
    logits = pred_logits[0].astype(jnp.float32)                # (Q, C) — VPU path stays f32
    q, c = logits.shape
    h, w = pred_masks.shape[-2], pred_masks.shape[-1]
    masks_rows = pred_masks[0].reshape(q * h, w).astype(jnp.bfloat16)   # MXU path is bf16

    wy, wxT_pad = _interp_constants(h, w)
    kernel = functools.partial(_mdetr_seg_kernel, threshold=float(threshold),
                               num_queries=q, mask_h=h)
    cost = pl.CostEstimate(
        flops=2 * OUT_W_PAD * (h * w + OUT_H * h) + 6 * q * c,
        transcendentals=q * c,
        bytes_accessed=(logits.size * 4 + q * h * w * 2
                        + OUT_H * h * 2 + w * OUT_W_PAD * 2 + OUT_H * OUT_W_PAD),
    )
    out_pad = pl.pallas_call(
        kernel,
        out_shape=jax.ShapeDtypeStruct((OUT_H, OUT_W_PAD), jnp.int8),
        in_specs=[pl.BlockSpec(memory_space=pltpu.MemorySpace.VMEM)] * 4,
        out_specs=pl.BlockSpec(memory_space=pltpu.MemorySpace.VMEM),
        cost_estimate=cost,
    )(logits, masks_rows, wy, wxT_pad)
    # TODO(synk): if ever run with batch > 1, add a leading "parallel" grid axis over
    # batch (dimension_semantics=("parallel",)) so work shards across v7x's 2 TCs.
    # Kernel writes a lane-dense (224, 256) int8 slab; slice/cast to the module's
    # (224, 224) f32 (fuses into one cheap XLA op under jit).
    return out_pad[:, :OUT_W].astype(jnp.float32)


if __name__ == "__main__":
    key = jax.random.PRNGKey(0)
    B, Cimg, Himg, Wimg = 1, 3, 16, 16          # NCHW image input (module is batch-1 inference)
    Q, C, h, w = 8, 16, 16, 16                  # queries, classes(+no-object), mask res
    threshold = 0.3

    k1, k2, k3 = jax.random.split(key, 3)
    x = jax.random.normal(k1, (B, Cimg, Himg, Wimg), jnp.float32)

    # TODO(synk): the pretrained MDETR backbone/transformer loaded via torch.hub has no
    # Pallas equivalent; a tiny deterministic linear stand-in head produces its outputs.
    feat_dim = Cimg * Himg * Wimg
    w_logit = jax.random.normal(k2, (feat_dim, Q * C), jnp.float32) * 0.05
    w_mask = jax.random.normal(k3, (feat_dim, Q * h * w), jnp.float32) * 0.05

    @jax.jit
    def forward(x, w_logit, w_mask):
        # Stand-in head + post-process fused into a single dispatch.
        feat = x.reshape(x.shape[0], -1)                                  # (1, 768)
        pred_logits = (feat @ w_logit).reshape(x.shape[0], Q, C)
        pred_masks = (feat @ w_mask).reshape(x.shape[0], Q, h, w)
        return mdetr_seg_postprocess(pred_logits, pred_masks, threshold)

    seg = jax.block_until_ready(forward(x, w_logit, w_mask))
    assert seg.shape == (OUT_H, OUT_W) and seg.dtype == jnp.float32
    assert bool(jnp.all((seg == 0.0) | (seg == 1.0)))
    print("KERNEL_OK")
</pallas_src>

<mosaic_0001>
module attributes {stable_mosaic.version = 11 : i64} {
  func.func @_mdetr_seg_kernel(%arg0: memref<8x16xf32, #tpu.memory_space<vmem>>, %arg1: memref<128x16xbf16, #tpu.memory_space<vmem>>, %arg2: memref<224x16xbf16, #tpu.memory_space<vmem>>, %arg3: memref<16x256xbf16, #tpu.memory_space<vmem>>, %arg4: memref<224x256xi8, #tpu.memory_space<vmem>>) attributes {dimension_semantics = [], scalar_prefetch = 0 : i64, scratch_operands = 0 : i64, tpu.core_type = #tpu.core_type<tc>} {
    %c0 = arith.constant 0 : index
    %c0_0 = arith.constant 0 : index
    %0 = vector.load %arg0[%c0, %c0_0] : memref<8x16xf32, #tpu.memory_space<vmem>>, vector<8x16xf32>
    %cst = arith.constant dense<0xFF800000> : vector<8xf32>
    %1 = vector.multi_reduction <maximumf>, %0, %cst [1] : vector<8x16xf32> to vector<8xf32>
    %2 = vector.shape_cast %1 : vector<8xf32> to vector<8x1xf32>
    %3 = vector.broadcast %2 : vector<8x1xf32> to vector<8x16xf32>
    %4 = arith.subf %0, %3 : vector<8x16xf32>
    %5 = math.exp %4 : vector<8x16xf32>
    %cst_1 = arith.constant dense<0.000000e+00> : vector<8xf32>
    %6 = vector.multi_reduction <add>, %5, %cst_1 [1] : vector<8x16xf32> to vector<8xf32>
    %7 = vector.shape_cast %6 : vector<8xf32> to vector<8x1xf32>
    %8 = vector.extract_strided_slice %5 {offsets = [0, 15], sizes = [8, 1], strides = [1, 1]} : vector<8x16xf32> to vector<8x1xf32>
    %cst_2 = arith.constant 0.699999988 : f32
    %9 = vector.broadcast %cst_2 : f32 to vector<8x1xf32>
    %10 = arith.mulf %9, %7 : vector<8x1xf32>
    %11 = arith.cmpf olt, %8, %10 : vector<8x1xf32>
    %12 = tpu.iota {dimensions = array<i32: 0>} : vector<8x1xi32>
    %c8_i32 = arith.constant 8 : i32
    %13 = vector.broadcast %c8_i32 : i32 to vector<8x1xi32>
    %14 = arith.select %11, %12, %13 : vector<8x1xi1>, vector<8x1xi32>
    %15 = vector.shape_cast %14 : vector<8x1xi32> to vector<1x8x1xi32>
    %cst_3 = arith.constant dense<2147483647> : vector<1xi32>
    %16 = vector.multi_reduction <minsi>, %15, %cst_3 [1, 2] : vector<1x8x1xi32> to vector<1xi32>
    %17 = vector.shape_cast %16 : vector<1xi32> to vector<1x1x1xi32>
    %18 = vector.extract %17[0, 0, 0] : i32 from vector<1x1x1xi32>
    %c8_i32_4 = arith.constant 8 : i32
    %19 = arith.cmpi slt, %18, %c8_i32_4 : i32
    %c7_i32 = arith.constant 7 : i32
    %20 = arith.minsi %18, %c7_i32 : i32
    %c16_i32 = arith.constant 16 : i32
    %21 = arith.muli %20, %c16_i32 : i32
    %22 = tpu.assume_multiple %21, 16 : i32
    %23 = arith.index_cast %22 : i32 to index
    %c0_5 = arith.constant 0 : index
    %24 = vector.load %arg1[%23, %c0_5] : memref<128x16xbf16, #tpu.memory_space<vmem>>, vector<16x16xbf16>
    %c0_6 = arith.constant 0 : index
    %c0_7 = arith.constant 0 : index
    %25 = vector.load %arg3[%c0_6, %c0_7] : memref<16x256xbf16, #tpu.memory_space<vmem>>, vector<16x256xbf16>
    %cst_8 = arith.constant dense<0.000000e+00> : vector<16x256xf32>
    %26 = tpu.matmul %24, %25, %cst_8 {dimension_numbers = #tpu.dot_dimension_numbers<[1], [0], [0], [1], [0, 0, 1, 1], [], []>} : vector<16x16xbf16>, vector<16x256xbf16>, vector<16x256xf32> -> vector<16x256xf32>
    %c0_9 = arith.constant 0 : index
    %c0_10 = arith.constant 0 : index
    %27 = vector.load %arg2[%c0_9, %c0_10] : memref<224x16xbf16, #tpu.memory_space<vmem>>, vector<224x16xbf16>
    %28 = arith.truncf %26 : vector<16x256xf32> to vector<16x256xbf16>
    %cst_11 = arith.constant dense<0.000000e+00> : vector<224x256xf32>
    %29 = tpu.matmul %27, %28, %cst_11 {dimension_numbers = #tpu.dot_dimension_numbers<[1], [0], [0], [1], [0, 0, 1, 1], [], []>} : vector<224x16xbf16>, vector<16x256xbf16>, vector<224x256xf32> -> vector<224x256xf32>
    %cst_12 = arith.constant 0.000000e+00 : f32
    %30 = vector.broadcast %cst_12 : f32 to vector<224x256xf32>
    %31 = arith.cmpf ogt, %29, %30 : vector<224x256xf32>
    %32 = vector.broadcast %19 : i1 to vector<224x256xi1>
    %33 = arith.andi %31, %32 : vector<224x256xi1>
    %34 = arith.extui %33 : vector<224x256xi1> to vector<224x256xi8>
    %c0_13 = arith.constant 0 : index
    %c0_14 = arith.constant 0 : index
    %35 = vector.load %arg4[%c0_13, %c0_14] : memref<224x256xi8, #tpu.memory_space<vmem>>, vector<224x256xi8>
    tpu.vector_store %arg4[%c0_13, %c0_14], %34 {strides = array<i32>} : memref<224x256xi8, #tpu.memory_space<vmem>>, vector<224x256xi8>,
    return
  }
}

</mosaic_0001>

<llo_original>
// kernel: forward.1
$region0: #{forward.1}
  #allocation0 [shape = 'u32[]', space=smem, size = 0x4, offset = 0x4, fixed_abs, tag = 'smem constant byte address 0x4 - core index']
  #allocation1 [shape = 'u32[144,128]{1,0:T(1,128)}', space=vmem, size = 0x12000, scoped, tag = 'internal scratch']
  %s0 = inlined_call_operand.vmem [shape: f32[8,16], index: 0, kind: input, shape index: {}]
  %s1 = inlined_call_operand.vmem [shape: bf16[128,16], index: 1, kind: input, shape index: {}]
  %s2 = inlined_call_operand.vmem [shape: bf16[224,16], index: 2, kind: input, shape index: {}]
  %s3 = inlined_call_operand.vmem [shape: bf16[16,256], index: 3, kind: input, shape index: {}]
  %s4 = inlined_call_operand.vmem [shape: s8[224,256], index: 4, kind: output, shape index: {}]
  %s5 = sld [smem:[#allocation0]]
  $region26: #{forward.1} parent=0
    _
  %s7 = ssub.s32 1, %s5
  %s8 = scalar_select 0, %s7, %s5
  // Predicated region
  $region2: #{forward.1} parent=0 // pred_check
    _
  $region3: #{forward.1} parent=0 // pred_check_branch
    %10 = sbr.rel (0) target = $region5
  $region4: #{forward.1} parent=0 // pred_region
    _
  $region5: #{forward.1} parent=0 // pred_fallthru
    _
  // Predicated region
  $region6: #{forward.1} parent=0 // pred_check
    _
  $region7: #{forward.1} parent=0 // pred_check_branch
    %12 = sbr.rel (0) target = $region9
  $region8: #{forward.1} parent=0 // pred_region
    _
  $region9: #{forward.1} parent=0 // pred_fallthru
    _
  // Predicated region
  $region10: #{forward.1} parent=0 // pred_check
    _
  $region11: #{forward.1} parent=0 // pred_check_branch
    %14 = sbr.rel (0) target = $region13
  $region12: #{forward.1} parent=0 // pred_region
    _
  $region13: #{forward.1} parent=0 // pred_fallthru
    _
  // Predicated region
  $region14: #{forward.1} parent=0 // pred_check
    _
  $region15: #{forward.1} parent=0 // pred_check_branch
    %16 = sbr.rel (0) target = $region17
  $region16: #{forward.1} parent=0 // pred_region
    _
  $region17: #{forward.1} parent=0 // pred_fallthru
    _
  %v20 = vld [vmem:[%s0] sm:$0xff]
  %vm21 = vcmask 130048
  %v22 = vsel %vm21, %v20, -inf
  %23 = vmax.xlane.f32.xlu0 %v22
  %v24 = vpop.xlane.xlu0 %23
  %v25 = vsub.f32 %v20, %v24
  %v26 = vmul.f32 %v25, 1.442695
  %v27 = vpow.pop %v26
  %v28 = vsel %vm21, %v27, 0.0
  %29 = vadd.xlane.f32.xlu0 %v28
  %v30 = vpop.xlane.xlu0 %29
  %v31 = vmul.f32 %v30, 0.7
  %vm32 = vcmp.lt.f32.partialorder %v27, %v31
  %v33 = vlaneseq
  %v34 = vshrl.u32 %v33, 7
  %v35 = vsel %vm32, %v34, 8
  %vm36 = vcmask 130168
  %v37 = vsel %vm36, %v35, 2147483647
  %v38 = vand.u32 %v37, 65535
  %v39 = vshra.s32 %v37, 16
  %v40 = vcvt.s32.f32 %v38
  %v41 = vcvt.s32.f32 %v39
  %42 = vmin.xlane.f32.xlu0 %v41
  %v43 = vpop.xlane.xlu0 %42
  %vm44 = vcmp.eq.f32.partialorder %v41, %v43
  %v45 = vsel %vm44, %v40, inf
  %46 = vmin.xlane.f32.xlu0 %v45
  %v47 = vpop.xlane.xlu0 %46
  %v48 = vcvt.f32.s32 %v47
  %v49 = vcvt.f32.s32 %v43
  %v50 = vshll.u32 %v49, 16
  %v51 = vadd.s32 %v50, %v48
  %v52 = vrot.slane %v51, 4
  %vm53 = vcmp.lt.s32.totalorder %v51, %v52
  %v54 = vsel %vm53, %v51, %v52
  %v55 = vrot.slane %v54, 2
  %vm56 = vcmp.lt.s32.totalorder %v54, %v55
  %v57 = vsel %vm56, %v54, %v55
  %v58 = vrot.slane %v57, 1
  %vm59 = vcmp.lt.s32.totalorder %v57, %v58
  %v60 = vsel %vm59, %v57, %v58
  %s61 = vtos %v60
  %p62 = scmp.lt.s32.totalorder %s61, 8
  %p63 = scmp.lt.s32.totalorder %s61, 7
  %s64 = scalar_select %p63, %s61, 7
  %s65 = smul.u32 %s64, 16
  %s66 = sshra.s32 %s65, 3
  %s67 = sand.u32 %s65, 7
  %s68 = smul.addr %s66, 4
  %s69 = scalar_lea.vmem %s1, %s68
  %v70 = vld [vmem:[%s69] sm:$0xf]
  %v71 = vld [vmem:[%s69 + $0x4] sm:$0xf]
  %v72 = vld [vmem:[%s3] sm:$0xff]
  %v73 = vld [vmem:[%s3 + $0x8] sm:$0xff]
  %v76 = vunpack.c.l.b16 %v70
  %v77 = vunpack.c.l.b16 %v71
  %v78 = vpack.c.b16 %v77, %v76
  %v81 = vunpack.c.l.b16 %v72
  %v82 = vunpack.c.h.b16 %v72
  %v83 = vunpack.c.l.b16 %v73
  %v84 = vunpack.c.h.b16 %v73
  %v85 = vpack.c.b16 %v83, %v81
  %v86 = vpack.c.b16 %v84, %v82
  %v90 = vsel %vm21, %v78, 0
  %92 = vmatprep.subr.bf16.mxu0 %v86
  %93 = vmatpush1.bf16.msra.mxu0 %v85
  %94 = vmatprep.subr.bf16.mxu0 0
  %95 = vmatpush1.bf16.msra.mxu0 0
  %96 = vmatprep.subr.bf16.mxu0 0
  %97 = vmatpush1.bf16.msra.mxu0 0
  %98 = vmatprep.subr.bf16.mxu0 0
  %99 = vmatpush1.bf16.msra.mxu0 0
  %100 = vmatprep.subr.bf16.mxu0 0
  %101 = vmatpush1.bf16.msra.mxu0 0
  %102 = vmatprep.subr.bf16.mxu0 0
  %103 = vmatpush1.bf16.msra.mxu0 0
  %104 = vmatprep.subr.bf16.mxu0 0
  %105 = vmatpush1.bf16.msra.mxu0 0
  %106 = vmatprep.subr.bf16.mxu0 0
  %107 = vmatpush1.bf16.msra.mxu0 0
  %108 = vmatprep.subr.bf16.mxu0 0
  %109 = vmatpush1.bf16.msra.mxu0 0
  %110 = vmatprep.subr.bf16.mxu0 0
  %111 = vmatpush1.bf16.msra.mxu0 0
  %112 = vmatprep.subr.bf16.mxu0 0
  %113 = vmatpush1.bf16.msra.mxu0 0
  %114 = vmatprep.subr.bf16.mxu0 0
  %115 = vmatpush1.bf16.msra.mxu0 0
  %116 = vmatprep.subr.bf16.mxu0 0
  %117 = vmatpush1.bf16.msra.mxu0 0
  %118 = vmatprep.subr.bf16.mxu0 0
  %119 = vmatpush1.bf16.msra.mxu0 0
  %120 = vmatprep.subr.bf16.mxu0 0
  %121 = vmatpush1.bf16.msra.mxu0 0
  %122 = vmatprep.subr.bf16.mxu0 0
  %123 = vmatpush1.bf16.msra.mxu0 0
  %124 = vmatprep.mubr.bf16.mxu0 0
  %125 = vmatmul.mubr.bf16.gmra.mrb[0].mxu0 %v90
  %v126 = vpop.f32.mrb[0].mxu0
  %v127 = vadd.f32 0.0, %v126
  %v128 = vpop.f32.mrb[0].mxu0
  %v129 = vadd.f32 0.0, %v128
  %v130 = vpop.f32.mrb[0].mxu0
  %v131 = vadd.f32 0.0, %v130
  %v132 = vpop.f32.mrb[0].mxu0
  %v133 = vadd.f32 0.0, %v132
  %134 = vdwg.mxu0
  %v135 = vld [vmem:[%s2] sm:$0xf]
  %v136 = vld [vmem:[%s2 + $0x4] sm:$0xf]
  %v137 = vld [vmem:[%s2 + $0x8] sm:$0xf]
  %v138 = vld [vmem:[%s2 + $0xc] sm:$0xf]
  %v139 = vld [vmem:[%s2 + $0x10] sm:$0xf]
  %v140 = vld [vmem:[%s2 + $0x14] sm:$0xf]
  %v141 = vld [vmem:[%s2 + $0x18] sm:$0xf]
  %v142 = vld [vmem:[%s2 + $0x1c] sm:$0xf]
  %v143 = vld [vmem:[%s2 + $0x20] sm:$0xf]
  %v144 = vld [vmem:[%s2 + $0x24] sm:$0xf]
  %v145 = vld [vmem:[%s2 + $0x28] sm:$0xf]
  %v146 = vld [vmem:[%s2 + $0x2c] sm:$0xf]
  %v147 = vld [vmem:[%s2 + $0x30] sm:$0xf]
  %v148 = vld [vmem:[%s2 + $0x34] sm:$0xf]
  %v149 = vld [vmem:[%s2 + $0x38] sm:$0xf]
  %v150 = vld [vmem:[%s2 + $0x3c] sm:$0xf]
  %v151 = vld [vmem:[%s2 + $0x40] sm:$0xf]
  %v152 = vld [vmem:[%s2 + $0x44] sm:$0xf]
  %v153 = vld [vmem:[%s2 + $0x48] sm:$0xf]
  %v154 = vld [vmem:[%s2 + $0x4c] sm:$0xf]
  %v155 = vld [vmem:[%s2 + $0x50] sm:$0xf]
  %v156 = vld [vmem:[%s2 + $0x54] sm:$0xf]
  %v157 = vld [vmem:[%s2 + $0x58] sm:$0xf]
  %v158 = vld [vmem:[%s2 + $0x5c] sm:$0xf]
  %v159 = vld [vmem:[%s2 + $0x60] sm:$0xf]
  %v160 = vld [vmem:[%s2 + $0x64] sm:$0xf]
  %v161 = vld [vmem:[%s2 + $0x68] sm:$0xf]
  %v162 = vld [vmem:[%s2 + $0x6c] sm:$0xf]
  %v163 = vpack.c.bf16 %v131, %v127
  %v164 = vpack.c.bf16 %v133, %v129
  %v193 = vunpack.c.l.b16 %v135
  %v194 = vunpack.c.l.b16 %v136
  %v195 = vunpack.c.l.b16 %v137
  %v196 = vunpack.c.l.b16 %v138
  %v197 = vunpack.c.l.b16 %v139
  %v198 = vunpack.c.l.b16 %v140
  %v199 = vunpack.c.l.b16 %v141
  %v200 = vunpack.c.l.b16 %v142
  %v201 = vunpack.c.l.b16 %v143
  %v202 = vunpack.c.l.b16 %v144
  %v203 = vunpack.c.l.b16 %v145
  %v204 = vunpack.c.l.b16 %v146
  %v205 = vunpack.c.l.b16 %v147
  %v206 = vunpack.c.l.b16 %v148
  %v207 = vunpack.c.l.b16 %v149
  %v208 = vunpack.c.l.b16 %v150
  %v209 = vunpack.c.l.b16 %v151
  %v210 = vunpack.c.l.b16 %v152
  %v211 = vunpack.c.l.b16 %v153
  %v212 = vunpack.c.l.b16 %v154
  %v213 = vunpack.c.l.b16 %v155
  %v214 = vunpack.c.l.b16 %v156
  %v215 = vunpack.c.l.b16 %v157
  %v216 = vunpack.c.l.b16 %v158
  %v217 = vunpack.c.l.b16 %v159
  %v218 = vunpack.c.l.b16 %v160
  %v219 = vunpack.c.l.b16 %v161
  %v220 = vunpack.c.l.b16 %v162
  %v221 = vpack.c.b16 %v194, %v193
  %v222 = vpack.c.b16 %v196, %v195
  %v223 = vpack.c.b16 %v198, %v197
  %v224 = vpack.c.b16 %v200, %v199
  %v225 = vpack.c.b16 %v202, %v201
  %v226 = vpack.c.b16 %v204, %v203
  %v227 = vpack.c.b16 %v206, %v205
  %v228 = vpack.c.b16 %v208, %v207
  %v229 = vpack.c.b16 %v210, %v209
  %v230 = vpack.c.b16 %v212, %v211
  %v231 = vpack.c.b16 %v214, %v213
  %v232 = vpack.c.b16 %v216, %v215
  %v233 = vpack.c.b16 %v218, %v217
  %v234 = vpack.c.b16 %v220, %v219
  %v236 = vsel %vm21, %v221, 0
  %v239 = vsel %vm21, %v222, 0
  %v242 = vsel %vm21, %v223, 0
  %v245 = vsel %vm21, %v224, 0
  %v248 = vsel %vm21, %v225, 0
  %v251 = vsel %vm21, %v226, 0
  %v254 = vsel %vm21, %v227, 0
  %v257 = vsel %vm21, %v228, 0
  %v260 = vsel %vm21, %v229, 0
  %v263 = vsel %vm21, %v230, 0
  %v266 = vsel %vm21, %v231, 0
  %v269 = vsel %vm21, %v232, 0
  %v272 = vsel %vm21, %v233, 0
  %v275 = vsel %vm21, %v234, 0
  %277 = vmatprep.subr.bf16.mxu0 %v164
  %278 = vmatpush1.bf16.msra.mxu0 %v163
  %279 = vmatprep.subr.bf16.mxu0 0
  %280 = vmatpush1.bf16.msra.mxu0 0
  %281 = vmatprep.subr.bf16.mxu0 0
  %282 = vmatpush1.bf16.msra.mxu0 0
  %283 = vmatprep.subr.bf16.mxu0 0
  %284 = vmatpush1.bf16.msra.mxu0 0
  %285 = vmatprep.subr.bf16.mxu0 0
  %286 = vmatpush1.bf16.msra.mxu0 0
  %287 = vmatprep.subr.bf16.mxu0 0
  %288 = vmatpush1.bf16.msra.mxu0 0
  %289 = vmatprep.subr.bf16.mxu0 0
  %290 = vmatpush1.bf16.msra.mxu0 0
  %291 = vmatprep.subr.bf16.mxu0 0
  %292 = vmatpush1.bf16.msra.mxu0 0
  %293 = vmatprep.subr.bf16.mxu0 0
  %294 = vmatpush1.bf16.msra.mxu0 0
  %295 = vmatprep.subr.bf16.mxu0 0
  %296 = vmatpush1.bf16.msra.mxu0 0
  %297 = vmatprep.subr.bf16.mxu0 0
  %298 = vmatpush1.bf16.msra.mxu0 0
  %299 = vmatprep.subr.bf16.mxu0 0
  %300 = vmatpush1.bf16.msra.mxu0 0
  %301 = vmatprep.subr.bf16.mxu0 0
  %302 = vmatpush1.bf16.msra.mxu0 0
  %303 = vmatprep.subr.bf16.mxu0 0
  %304 = vmatpush1.bf16.msra.mxu0 0
  %305 = vmatprep.subr.bf16.mxu0 0
  %306 = vmatpush1.bf16.msra.mxu0 0
  %307 = vmatprep.subr.bf16.mxu0 0
  %308 = vmatpush1.bf16.msra.mxu0 0
  %309 = vmatprep.mubr.bf16.mxu0 0
  %310 = vmatmul.mubr.bf16.gmra.mrb[0].mxu0 %v236
  %v311 = vpop.f32.mrb[0].mxu0
  %v312 = vadd.f32 0.0, %v311
  %v313 = vpop.f32.mrb[0].mxu0
  %v314 = vadd.f32 0.0, %v313
  %v315 = vpop.f32.mrb[0].mxu0
  %v316 = vadd.f32 0.0, %v315
  %v317 = vpop.f32.mrb[0].mxu0
  %v318 = vadd.f32 0.0, %v317
  %319 = vmatprep.mubr.bf16.mxu0 0
  %320 = vmatmul.mubr.bf16.gmra.mrb[0].mxu0 %v239
  %v321 = vpop.f32.mrb[0].mxu0
  %v322 = vadd.f32 0.0, %v321
  %v323 = vpop.f32.mrb[0].mxu0
  %v324 = vadd.f32 0.0, %v323
  %v325 = vpop.f32.mrb[0].mxu0
  %v326 = vadd.f32 0.0, %v325
  %v327 = vpop.f32.mrb[0].mxu0
  %v328 = vadd.f32 0.0, %v327
  %329 = vmatprep.mubr.bf16.mxu0 0
  %330 = vmatmul.mubr.bf16.gmra.mrb[0].mxu0 %v242
  %v331 = vpop.f32.mrb[0].mxu0
  %v332 = vadd.f32 0.0, %v331
  %v333 = vpop.f32.mrb[0].mxu0
  %v334 = vadd.f32 0.0, %v333
  %v335 = vpop.f32.mrb[0].mxu0
  %v336 = vadd.f32 0.0, %v335
  %v337 = vpop.f32.mrb[0].mxu0
  %v338 = vadd.f32 0.0, %v337
  %339 = vmatprep.mubr.bf16.mxu0 0
  %340 = vmatmul.mubr.bf16.gmra.mrb[0].mxu0 %v245
  %v341 = vpop.f32.mrb[0].mxu0
  %v342 = vadd.f32 0.0, %v341
  %v343 = vpop.f32.mrb[0].mxu0
  %v344 = vadd.f32 0.0, %v343
  %v345 = vpop.f32.mrb[0].mxu0
  %v346 = vadd.f32 0.0, %v345
  %v347 = vpop.f32.mrb[0].mxu0
  %v348 = vadd.f32 0.0, %v347
  %349 = vmatprep.mubr.bf16.mxu0 0
  %350 = vmatmul.mubr.bf16.gmra.mrb[0].mxu0 %v248
  %v351 = vpop.f32.mrb[0].mxu0
  %v352 = vadd.f32 0.0, %v351
  %v353 = vpop.f32.mrb[0].mxu0
  %v354 = vadd.f32 0.0, %v353
  %v355 = vpop.f32.mrb[0].mxu0
  %v356 = vadd.f32 0.0, %v355
  %v357 = vpop.f32.mrb[0].mxu0
  %v358 = vadd.f32 0.0, %v357
  %359 = vmatprep.mubr.bf16.mxu0 0
  %360 = vmatmul.mubr.bf16.gmra.mrb[0].mxu0 %v251
  %v361 = vpop.f32.mrb[0].mxu0
  %v362 = vadd.f32 0.0, %v361
  %v363 = vpop.f32.mrb[0].mxu0
  %v364 = vadd.f32 0.0, %v363
  %v365 = vpop.f32.mrb[0].mxu0
  %v366 = vadd.f32 0.0, %v365
  %v367 = vpop.f32.mrb[0].mxu0
  %v368 = vadd.f32 0.0, %v367
  %369 = vmatprep.mubr.bf16.mxu0 0
  %370 = vmatmul.mubr.bf16.gmra.mrb[0].mxu0 %v254
  %v371 = vpop.f32.mrb[0].mxu0
  %v372 = vadd.f32 0.0, %v371
  %v373 = vpop.f32.mrb[0].mxu0
  %v374 = vadd.f32 0.0, %v373
  %v375 = vpop.f32.mrb[0].mxu0
  %v376 = vadd.f32 0.0, %v375
  %v377 = vpop.f32.mrb[0].mxu0
  %v378 = vadd.f32 0.0, %v377
  %379 = vmatprep.mubr.bf16.mxu0 0
  %380 = vmatmul.mubr.bf16.gmra.mrb[0].mxu0 %v257
  %v381 = vpop.f32.mrb[0].mxu0
  %v382 = vadd.f32 0.0, %v381
  %v383 = vpop.f32.mrb[0].mxu0
  %v384 = vadd.f32 0.0, %v383
  %v385 = vpop.f32.mrb[0].mxu0
  %v386 = vadd.f32 0.0, %v385
  %v387 = vpop.f32.mrb[0].mxu0
  %v388 = vadd.f32 0.0, %v387
  %389 = vmatprep.mubr.bf16.mxu0 0
  %390 = vmatmul.mubr.bf16.gmra.mrb[0].mxu0 %v260
  %v391 = vpop.f32.mrb[0].mxu0
  %v392 = vadd.f32 0.0, %v391
  %v393 = vpop.f32.mrb[0].mxu0
  %v394 = vadd.f32 0.0, %v393
  %v395 = vpop.f32.mrb[0].mxu0
  %v396 = vadd.f32 0.0, %v395
  %v397 = vpop.f32.mrb[0].mxu0
  %v398 = vadd.f32 0.0, %v397
  %399 = vmatprep.mubr.bf16.mxu0 0
  %400 = vmatmul.mubr.bf16.gmra.mrb[0].mxu0 %v263
  %v401 = vpop.f32.mrb[0].mxu0
  %v402 = vadd.f32 0.0, %v401
  %v403 = vpop.f32.mrb[0].mxu0
  %v404 = vadd.f32 0.0, %v403
  %v405 = vpop.f32.mrb[0].mxu0
  %v406 = vadd.f32 0.0, %v405
  %v407 = vpop.f32.mrb[0].mxu0
  %v408 = vadd.f32 0.0, %v407
  %409 = vmatprep.mubr.bf16.mxu0 0
  %410 = vmatmul.mubr.bf16.gmra.mrb[0].mxu0 %v266
  %v411 = vpop.f32.mrb[0].mxu0
  %v412 = vadd.f32 0.0, %v411
  %v413 = vpop.f32.mrb[0].mxu0
  %v414 = vadd.f32 0.0, %v413
  %v415 = vpop.f32.mrb[0].mxu0
  %v416 = vadd.f32 0.0, %v415
  %v417 = vpop.f32.mrb[0].mxu0
  %v418 = vadd.f32 0.0, %v417
  %419 = vmatprep.mubr.bf16.mxu0 0
  %420 = vmatmul.mubr.bf16.gmra.mrb[0].mxu0 %v269
  %v421 = vpop.f32.mrb[0].mxu0
  %v422 = vadd.f32 0.0, %v421
  %v423 = vpop.f32.mrb[0].mxu0
  %v424 = vadd.f32 0.0, %v423
  %v425 = vpop.f32.mrb[0].mxu0
  %v426 = vadd.f32 0.0, %v425
  %v427 = vpop.f32.mrb[0].mxu0
  %v428 = vadd.f32 0.0, %v427
  %429 = vmatprep.mubr.bf16.mxu0 0
  %430 = vmatmul.mubr.bf16.gmra.mrb[0].mxu0 %v272
  %v431 = vpop.f32.mrb[0].mxu0
  %v432 = vadd.f32 0.0, %v431
  %v433 = vpop.f32.mrb[0].mxu0
  %v434 = vadd.f32 0.0, %v433
  %v435 = vpop.f32.mrb[0].mxu0
  %v436 = vadd.f32 0.0, %v435
  %v437 = vpop.f32.mrb[0].mxu0
  %v438 = vadd.f32 0.0, %v437
  %439 = vmatprep.mubr.bf16.mxu0 0
  %440 = vmatmul.mubr.bf16.gmra.mrb[0].mxu0 %v275
  %v441 = vpop.f32.mrb[0].mxu0
  %v442 = vadd.f32 0.0, %v441
  %v443 = vpop.f32.mrb[0].mxu0
  %v444 = vadd.f32 0.0, %v443
  %v445 = vpop.f32.mrb[0].mxu0
  %v446 = vadd.f32 0.0, %v445
  %v447 = vpop.f32.mrb[0].mxu0
  %v448 = vadd.f32 0.0, %v447
  %449 = vdwg.mxu0
  %vm450 = vcmp.gt.f32.partialorder %v312, 0.0
  %vm451 = vcmp.gt.f32.partialorder %v314, 0.0
  %vm452 = vcmp.gt.f32.partialorder %v316, 0.0
  %vm453 = vcmp.gt.f32.partialorder %v318, 0.0
  %vm454 = vcmp.gt.f32.partialorder %v322, 0.0
  %vm455 = vcmp.gt.f32.partialorder %v324, 0.0
  %vm456 = vcmp.gt.f32.partialorder %v326, 0.0
  %vm457 = vcmp.gt.f32.partialorder %v328, 0.0
  %vm458 = vcmp.gt.f32.partialorder %v332, 0.0
  %vm459 = vcmp.gt.f32.partialorder %v334, 0.0
  %vm460 = vcmp.gt.f32.partialorder %v336, 0.0
  %vm461 = vcmp.gt.f32.partialorder %v338, 0.0
  %vm462 = vcmp.gt.f32.partialorder %v342, 0.0
  %vm463 = vcmp.gt.f32.partialorder %v344, 0.0
  %vm464 = vcmp.gt.f32.partialorder %v346, 0.0
  %vm465 = vcmp.gt.f32.partialorder %v348, 0.0
  %vm466 = vcmp.gt.f32.partialorder %v352, 0.0
  %vm467 = vcmp.gt.f32.partialorder %v354, 0.0
  %vm468 = vcmp.gt.f32.partialorder %v356, 0.0
  %vm469 = vcmp.gt.f32.partialorder %v358, 0.0
  %vm470 = vcmp.gt.f32.partialorder %v362, 0.0
  %vm471 = vcmp.gt.f32.partialorder %v364, 0.0
  %vm472 = vcmp.gt.f32.partialorder %v366, 0.0
  %vm473 = vcmp.gt.f32.partialorder %v368, 0.0
  %vm474 = vcmp.gt.f32.partialorder %v372, 0.0
  %vm475 = vcmp.gt.f32.partialorder %v374, 0.0
  %vm476 = vcmp.gt.f32.partialorder %v376, 0.0
  %vm477 = vcmp.gt.f32.partialorder %v378, 0.0
  %vm478 = vcmp.gt.f32.partialorder %v382, 0.0
  %vm479 = vcmp.gt.f32.partialorder %v384, 0.0
  %vm480 = vcmp.gt.f32.partialorder %v386, 0.0
  %vm481 = vcmp.gt.f32.partialorder %v388, 0.0
  %vm482 = vcmp.gt.f32.partialorder %v392, 0.0
  %vm483 = vcmp.gt.f32.partialorder %v394, 0.0
  %vm484 = vcmp.gt.f32.partialorder %v396, 0.0
  %vm485 = vcmp.gt.f32.partialorder %v398, 0.0
  %vm486 = vcmp.gt.f32.partialorder %v402, 0.0
  %vm487 = vcmp.gt.f32.partialorder %v404, 0.0
  %vm488 = vcmp.gt.f32.partialorder %v406, 0.0
  %vm489 = vcmp.gt.f32.partialorder %v408, 0.0
  %vm490 = vcmp.gt.f32.partialorder %v412, 0.0
  %vm491 = vcmp.gt.f32.partialorder %v414, 0.0
  %vm492 = vcmp.gt.f32.partialorder %v416, 0.0
  %vm493 = vcmp.gt.f32.partialorder %v418, 0.0
  %vm494 = vcmp.gt.f32.partialorder %v422, 0.0
  %vm495 = vcmp.gt.f32.partialorder %v424, 0.0
  %vm496 = vcmp.gt.f32.partialorder %v426, 0.0
  %vm497 = vcmp.gt.f32.partialorder %v428, 0.0
  %vm498 = vcmp.gt.f32.partialorder %v432, 0.0
  %vm499 = vcmp.gt.f32.partialorder %v434, 0.0
  %vm500 = vcmp.gt.f32.partialorder %v436, 0.0
  %vm501 = vcmp.gt.f32.partialorder %v438, 0.0
  %vm502 = vcmp.gt.f32.partialorder %v442, 0.0
  %vm503 = vcmp.gt.f32.partialorder %v444, 0.0
  %vm504 = vcmp.gt.f32.partialorder %v446, 0.0
  %vm505 = vcmp.gt.f32.partialorder %v448, 0.0
  %s506 = scalar_select %p62, 1, 0
  %v507 = vstv %s506
  %vm508 = vcmp.eq.s32.totalorder %v507, 1
  %vm509 = vmand %vm450, %vm508
  %vm510 = vmand %vm451, %vm508
  %vm511 = vmand %vm452, %vm508
  %vm512 = vmand %vm453, %vm508
  %vm513 = vmand %vm454, %vm508
  %vm514 = vmand %vm455, %vm508
  %vm515 = vmand %vm456, %vm508
  %vm516 = vmand %vm457, %vm508
  %vm517 = vmand %vm458, %vm508
  %vm518 = vmand %vm459, %vm508
  %vm519 = vmand %vm460, %vm508
  %vm520 = vmand %vm461, %vm508
  %vm521 = vmand %vm462, %vm508
  %vm522 = vmand %vm463, %vm508
  %vm523 = vmand %vm464, %vm508
  %vm524 = vmand %vm465, %vm508
  %vm525 = vmand %vm466, %vm508
  %vm526 = vmand %vm467, %vm508
  %vm527 = vmand %vm468, %vm508
  %vm528 = vmand %vm469, %vm508
  %vm529 = vmand %vm470, %vm508
  %vm530 = vmand %vm471, %vm508
  %vm531 = vmand %vm472, %vm508
  %vm532 = vmand %vm473, %vm508
  %vm533 = vmand %vm474, %vm508
  %vm534 = vmand %vm475, %vm508
  %vm535 = vmand %vm476, %vm508
  %vm536 = vmand %vm477, %vm508
  %vm537 = vmand %vm478, %vm508
  %vm538 = vmand %vm479, %vm508
  %vm539 = vmand %vm480, %vm508
  %vm540 = vmand %vm481, %vm508
  %vm541 = vmand %vm482, %vm508
  %vm542 = vmand %vm483, %vm508
  %vm543 = vmand %vm484, %vm508
  %vm544 = vmand %vm485, %vm508
  %vm545 = vmand %vm486, %vm508
  %vm546 = vmand %vm487, %vm508
  %vm547 = vmand %vm488, %vm508
  %vm548 = vmand %vm489, %vm508
  %vm549 = vmand %vm490, %vm508
  %vm550 = vmand %vm491, %vm508
  %vm551 = vmand %vm492, %vm508
  %vm552 = vmand %vm493, %vm508
  %vm553 = vmand %vm494, %vm508
  %vm554 = vmand %vm495, %vm508
  %vm555 = vmand %vm496, %vm508
  %vm556 = vmand %vm497, %vm508
  %vm557 = vmand %vm498, %vm508
  %vm558 = vmand %vm499, %vm508
  %vm559 = vmand %vm500, %vm508
  %vm560 = vmand %vm501, %vm508
  %vm561 = vmand %vm502, %vm508
  %vm562 = vmand %vm503, %vm508
  %vm563 = vmand %vm504, %vm508
  %vm564 = vmand %vm505, %vm508
  %vm565 = vmpackc.low %vm511, %vm509
  %vm566 = vmpackc.low %vm515, %vm513
  %vm567 = vmpackc.even %vm566, %vm565
  %vm568 = vmpackc.low %vm512, %vm510
  %vm569 = vmpackc.low %vm516, %vm514
  %vm570 = vmpackc.even %vm569, %vm568
  %vm571 = vmpackc.low %vm519, %vm517
  %vm572 = vmpackc.low %vm523, %vm521
  %vm573 = vmpackc.even %vm572, %vm571
  %vm574 = vmpackc.low %vm520, %vm518
  %vm575 = vmpackc.low %vm524, %vm522
  %vm576 = vmpackc.even %vm575, %vm574
  %vm577 = vmpackc.low %vm527, %vm525
  %vm578 = vmpackc.low %vm531, %vm529
  %vm579 = vmpackc.even %vm578, %vm577
  %vm580 = vmpackc.low %vm528, %vm526
  %vm581 = vmpackc.low %vm532, %vm530
  %vm582 = vmpackc.even %vm581, %vm580
  %vm583 = vmpackc.low %vm535, %vm533
  %vm584 = vmpackc.low %vm539, %vm537
  %vm585 = vmpackc.even %vm584, %vm583
  %vm586 = vmpackc.low %vm536, %vm534
  %vm587 = vmpackc.low %vm540, %vm538
  %vm588 = vmpackc.even %vm587, %vm586
  %vm589 = vmpackc.low %vm543, %vm541
  %vm590 = vmpackc.low %vm547, %vm545
  %vm591 = vmpackc.even %vm590, %vm589
  %vm592 = vmpackc.low %vm544, %vm542
  %vm593 = vmpackc.low %vm548, %vm546
  %vm594 = vmpackc.even %vm593, %vm592
  %vm595 = vmpackc.low %vm551, %vm549
  %vm596 = vmpackc.low %vm555, %vm553
  %vm597 = vmpackc.even %vm596, %vm595
  %vm598 = vmpackc.low %vm552, %vm550
  %vm599 = vmpackc.low %vm556, %vm554
  %vm600 = vmpackc.even %vm599, %vm598
  %vm601 = vmpackc.low %vm559, %vm557
  %vm602 = vmpackc.low %vm563, %vm561
  %vm603 = vmpackc.even %vm602, %vm601
  %vm604 = vmpackc.low %vm560, %vm558
  %vm605 = vmpackc.low %vm564, %vm562
  %vm606 = vmpackc.even %vm605, %vm604
  %v607 = vsel %vm567, 16843009, 0
  %v608 = vsel %vm570, 16843009, 0
  %v609 = vsel %vm573, 16843009, 0
  %v610 = vsel %vm576, 16843009, 0
  %v611 = vsel %vm579, 16843009, 0
  %v612 = vsel %vm582, 16843009, 0
  %v613 = vsel %vm585, 16843009, 0
  %v614 = vsel %vm588, 16843009, 0
  %v615 = vsel %vm591, 16843009, 0
  %v616 = vsel %vm594, 16843009, 0
  %v617 = vsel %vm597, 16843009, 0
  %v618 = vsel %vm600, 16843009, 0
  %v619 = vsel %vm603, 16843009, 0
  %v620 = vsel %vm606, 16843009, 0
  %v621 = vunpack.c.0.s8 %v607
  %v622 = vunpack.c.0.s8 %v608
  %v623 = vunpack.c.1.s8 %v607
  %v624 = vunpack.c.1.s8 %v608
  %v625 = vunpack.c.2.s8 %v607
  %v626 = vunpack.c.2.s8 %v608
  %v627 = vunpack.c.3.s8 %v607
  %v628 = vunpack.c.3.s8 %v608
  %v629 = vunpack.c.0.s8 %v609
  %v630 = vunpack.c.0.s8 %v610
  %v631 = vunpack.c.1.s8 %v609
  %v632 = vunpack.c.1.s8 %v610
  %v633 = vunpack.c.2.s8 %v609
  %v634 = vunpack.c.2.s8 %v610
  %v635 = vunpack.c.3.s8 %v609
  %v636 = vunpack.c.3.s8 %v610
  %v637 = vunpack.c.0.s8 %v611
  %v638 = vunpack.c.0.s8 %v612
  %v639 = vunpack.c.1.s8 %v611
  %v640 = vunpack.c.1.s8 %v612
  %v641 = vunpack.c.2.s8 %v611
  %v642 = vunpack.c.2.s8 %v612
  %v643 = vunpack.c.3.s8 %v611
  %v644 = vunpack.c.3.s8 %v612
  %v645 = vunpack.c.0.s8 %v613
  %v646 = vunpack.c.0.s8 %v614
  %v647 = vunpack.c.1.s8 %v613
  %v648 = vunpack.c.1.s8 %v614
  %v649 = vunpack.c.2.s8 %v613
  %v650 = vunpack.c.2.s8 %v614
  %v651 = vunpack.c.3.s8 %v613
  %v652 = vunpack.c.3.s8 %v614
  %v653 = vunpack.c.0.s8 %v615
  %v654 = vunpack.c.0.s8 %v616
  %v655 = vunpack.c.1.s8 %v615
  %v656 = vunpack.c.1.s8 %v616
  %v657 = vunpack.c.2.s8 %v615
  %v658 = vunpack.c.2.s8 %v616
  %v659 = vunpack.c.3.s8 %v615
  %v660 = vunpack.c.3.s8 %v616
  %v661 = vunpack.c.0.s8 %v617
  %v662 = vunpack.c.0.s8 %v618
  %v663 = vunpack.c.1.s8 %v617
  %v664 = vunpack.c.1.s8 %v618
  %v665 = vunpack.c.2.s8 %v617
  %v666 = vunpack.c.2.s8 %v618
  %v667 = vunpack.c.3.s8 %v617
  %v668 = vunpack.c.3.s8 %v618
  %v669 = vunpack.c.0.s8 %v619
  %v670 = vunpack.c.0.s8 %v620
  %v671 = vunpack.c.1.s8 %v619
  %v672 = vunpack.c.1.s8 %v620
  %v673 = vunpack.c.2.s8 %v619
  %v674 = vunpack.c.2.s8 %v620
  %v675 = vunpack.c.3.s8 %v619
  %v676 = vunpack.c.3.s8 %v620
  %v677 = vpack.c.b16 %v622, %v621
  %v678 = vpack.c.b8 %v677, %v677
  %v679 = vpack.c.b16 %v624, %v623
  %v680 = vpack.c.b8 %v679, %v679
  %v681 = vpack.c.b16 %v626, %v625
  %v682 = vpack.c.b8 %v681, %v681
  %v683 = vpack.c.b16 %v628, %v627
  %v684 = vpack.c.b8 %v683, %v683
  %v685 = vpack.c.b16 %v630, %v629
  %v686 = vpack.c.b8 %v685, %v685
  %v687 = vpack.c.b16 %v632, %v631
  %v688 = vpack.c.b8 %v687, %v687
  %v689 = vpack.c.b16 %v634, %v633
  %v690 = vpack.c.b8 %v689, %v689
  %v691 = vpack.c.b16 %v636, %v635
  %v692 = vpack.c.b8 %v691, %v691
  %v693 = vpack.c.b16 %v638, %v637
  %v694 = vpack.c.b8 %v693, %v693
  %v695 = vpack.c.b16 %v640, %v639
  %v696 = vpack.c.b8 %v695, %v695
  %v697 = vpack.c.b16 %v642, %v641
  %v698 = vpack.c.b8 %v697, %v697
  %v699 = vpack.c.b16 %v644, %v643
  %v700 = vpack.c.b8 %v699, %v699
  %v701 = vpack.c.b16 %v646, %v645
  %v702 = vpack.c.b8 %v701, %v701
  %v703 = vpack.c.b16 %v648, %v647
  %v704 = vpack.c.b8 %v703, %v703
  %v705 = vpack.c.b16 %v650, %v649
  %v706 = vpack.c.b8 %v705, %v705
  %v707 = vpack.c.b16 %v652, %v651
  %v708 = vpack.c.b8 %v707, %v707
  %v709 = vpack.c.b16 %v654, %v653
  %v710 = vpack.c.b8 %v709, %v709
  %v711 = vpack.c.b16 %v656, %v655
  %v712 = vpack.c.b8 %v711, %v711
  %v713 = vpack.c.b16 %v658, %v657
  %v714 = vpack.c.b8 %v713, %v713
  %v715 = vpack.c.b16 %v660, %v659
  %v716 = vpack.c.b8 %v715, %v715
  %v717 = vpack.c.b16 %v662, %v661
  %v718 = vpack.c.b8 %v717, %v717
  %v719 = vpack.c.b16 %v664, %v663
  %v720 = vpack.c.b8 %v719, %v719
  %v721 = vpack.c.b16 %v666, %v665
  %v722 = vpack.c.b8 %v721, %v721
  %v723 = vpack.c.b16 %v668, %v667
  %v724 = vpack.c.b8 %v723, %v723
  %v725 = vpack.c.b16 %v670, %v669
  %v726 = vpack.c.b8 %v725, %v725
  %v727 = vpack.c.b16 %v672, %v671
  %v728 = vpack.c.b8 %v727, %v727
  %v729 = vpack.c.b16 %v674, %v673
  %v730 = vpack.c.b8 %v729, %v729
  %v731 = vpack.c.b16 %v676, %v675
  %v732 = vpack.c.b8 %v731, %v731
  %733 = vst [vmem:[%s4] sm:$0xf] %v678
  %734 = vst [vmem:[%s4 + $0x4] sm:$0xf] %v680
  %735 = vst [vmem:[%s4 + $0x8] sm:$0xf] %v682
  %736 = vst [vmem:[%s4 + $0xc] sm:$0xf] %v684
  %737 = vst [vmem:[%s4 + $0x10] sm:$0xf] %v686
  %738 = vst [vmem:[%s4 + $0x14] sm:$0xf] %v688
  %739 = vst [vmem:[%s4 + $0x18] sm:$0xf] %v690
  %740 = vst [vmem:[%s4 + $0x1c] sm:$0xf] %v692
  %741 = vst [vmem:[%s4 + $0x20] sm:$0xf] %v694
  %742 = vst [vmem:[%s4 + $0x24] sm:$0xf] %v696
  %743 = vst [vmem:[%s4 + $0x28] sm:$0xf] %v698
  %744 = vst [vmem:[%s4 + $0x2c] sm:$0xf] %v700
  %745 = vst [vmem:[%s4 + $0x30] sm:$0xf] %v702
  %746 = vst [vmem:[%s4 + $0x34] sm:$0xf] %v704
  %747 = vst [vmem:[%s4 + $0x38] sm:$0xf] %v706
  %748 = vst [vmem:[%s4 + $0x3c] sm:$0xf] %v708
  %749 = vst [vmem:[%s4 + $0x40] sm:$0xf] %v710
  %750 = vst [vmem:[%s4 + $0x44] sm:$0xf] %v712
  %751 = vst [vmem:[%s4 + $0x48] sm:$0xf] %v714
  %752 = vst [vmem:[%s4 + $0x4c] sm:$0xf] %v716
  %753 = vst [vmem:[%s4 + $0x50] sm:$0xf] %v718
  %754 = vst [vmem:[%s4 + $0x54] sm:$0xf] %v720
  %755 = vst [vmem:[%s4 + $0x58] sm:$0xf] %v722
  %756 = vst [vmem:[%s4 + $0x5c] sm:$0xf] %v724
  %757 = vst [vmem:[%s4 + $0x60] sm:$0xf] %v726
  %758 = vst [vmem:[%s4 + $0x64] sm:$0xf] %v728
  %759 = vst [vmem:[%s4 + $0x68] sm:$0xf] %v730
  %760 = vst [vmem:[%s4 + $0x6c] sm:$0xf] %v732
  // Predicated region
  $region18: #{forward.1} parent=0 // pred_check
    _
  $region19: #{forward.1} parent=0 // pred_check_branch
    %762 = sbr.rel (0) target = $region21
  $region20: #{forward.1} parent=0 // pred_region
    _
  $region21: #{forward.1} parent=0 // pred_fallthru
    _
  // Predicated region
  $region22: #{forward.1} parent=0 // pred_check
    _
  $region23: #{forward.1} parent=0 // pred_check_branch
    %764 = sbr.rel (0) target = $region25
  $region24: #{forward.1} parent=0 // pred_region
    _
  $region25: #{forward.1} parent=0 // pred_fallthru
    _

</llo_original>
